<compile_context>
chip_gen: v7x
topology: tpu7x:2x2x1
jax: 0.10.0
libtpu: 0.0.40
codegen_flags: <defaults>
</compile_context>

<pallas_src>
import jax
import jax.numpy as jnp
from jax.experimental import pallas as pl
from jax.experimental.pallas import tpu as pltpu


def _neg_kernel(x_ref, o_ref):
    # Elementwise polarity inversion on the current VMEM tile (VPU work;
    # never the bottleneck for this HBM-bound op).
    o_ref[...] = -x_ref[...]


def _generation_tuning():
    """Return (target_block_bytes, vmem_ceiling_bytes) for the local TPU gen."""
    vmem_cap = 128 * 1024 * 1024
    try:
        info = pltpu.get_tpu_info()
        cap = getattr(info, "vmem_capacity_bytes", None)
        if cap:
            vmem_cap = int(cap)
    except Exception:
        pass
    if vmem_cap <= 64 * 1024 * 1024:
        # v7x-class: ~3.2 TB/s HBM but only 64 MiB VMEM -> big blocks, tight cap.
        return 8 * 1024 * 1024, 48 * 1024 * 1024
    # v5e / v6e: 128 MiB physical VMEM; 4 MiB is already on the flat part of
    # the bandwidth curve, no need to overshoot.
    return 4 * 1024 * 1024, 64 * 1024 * 1024


def _as_2d(audio):
    """Free (metadata-only, contiguous) 2-D view of the tensor. Never copies."""
    n = int(audio.size)
    if n % 128 == 0:
        # Lane-dense path: largest multiple of 128 (<=1024) that divides n.
        for w in range(1024, 0, -128):
            if n % w == 0:
                return audio.reshape(n // w, w)
    # Ragged path: collapse leading dims, keep the native last dim; the
    # partial lane tile is masked by Pallas (no pad, no slice).
    last = int(audio.shape[-1]) if audio.ndim >= 1 else 1
    return audio.reshape(n // last, last)


def _choose_block(rows, cols, itemsize, sub, target_bytes):
    """Pick (block_rows, block_cols) honouring the (8, 128) tiling rules."""
    row_bytes = cols * itemsize
    if row_bytes * sub <= target_bytes:
        # Full-width blocks; tile rows in sublane-multiple chunks.
        br = max(sub, (target_bytes // row_bytes) // sub * sub)
        return min(br, rows), cols  # br==rows (full dim) is always legal
    # Very wide rows: tile columns in multiples of 128 (partial tail masked).
    br = min(sub, rows)
    bc = (target_bytes // (br * itemsize)) // 128 * 128
    if bc >= cols or bc < 128:
        bc = cols  # full last dim is always legal
    return br, bc


def polarity_inversion(audio: jax.Array) -> jax.Array:
    """Negates `audio` (any shape, native dtype) with a Pallas TPU kernel."""
    orig_shape = audio.shape
    dtype = audio.dtype
    n = int(audio.size)
    if n == 0:
        # Guard zero-length grid; negation of an empty array is itself.
        return audio

    itemsize = int(jnp.dtype(dtype).itemsize)
    # dtype-native sublane multiple (sub-32-bit dtypes pack along sublanes).
    sub = 8 if itemsize >= 4 else (16 if itemsize == 2 else 32)

    target_block_bytes, vmem_ceiling = _generation_tuning()

    x2d = _as_2d(audio)
    rows, cols = x2d.shape
    br, bc = _choose_block(rows, cols, itemsize, sub, target_block_bytes)
    grid = (pl.cdiv(rows, br), pl.cdiv(cols, bc))
    block_bytes = br * bc * itemsize

    out2d = pl.pallas_call(
        _neg_kernel,
        out_shape=jax.ShapeDtypeStruct((rows, cols), dtype),
        grid_spec=pl.GridSpec(
            grid=grid,
            in_specs=[pl.BlockSpec((br, bc), lambda i, j: (i, j))],
            out_specs=pl.BlockSpec((br, bc), lambda i, j: (i, j)),
        ),
        compiler_params=pltpu.CompilerParams(
            dimension_semantics=("parallel", "parallel"),
            # 2 arrays x 2 pipeline buffers x block + headroom, capped below
            # the generation's physical VMEM (64 MiB on v7x).
            vmem_limit_bytes=int(min(vmem_ceiling,
                                     4 * block_bytes + 4 * 1024 * 1024)),
        ),
        cost_estimate=pl.CostEstimate(
            flops=n, transcendentals=0, bytes_accessed=2 * n * itemsize),
    )(x2d)

    return out2d.reshape(orig_shape)


if __name__ == "__main__":
    key = jax.random.PRNGKey(0)
    # Small audio batch: batch=2, channels=4, samples=256 (channel-first).
    audio = jax.random.normal(key, (2, 4, 256), dtype=jnp.float32)

    result = jax.block_until_ready(polarity_inversion(audio))
    assert result.shape == audio.shape
    assert result.dtype == audio.dtype
    assert jnp.allclose(result, -audio), "mismatch vs reference negation"

    # Ragged total size (not a multiple of 128): exercises the pad-free
    # fallback path with a masked partial lane tile.
    audio2 = jax.random.normal(jax.random.PRNGKey(1), (3, 2, 777), dtype=jnp.float32)
    result2 = jax.block_until_ready(polarity_inversion(audio2))
    assert jnp.allclose(result2, -audio2), "mismatch on ragged-size input"

    # Sub-32-bit dtype: exercises the dtype-native sublane rounding for bf16.
    audio3 = jax.random.normal(jax.random.PRNGKey(2), (2, 3, 500), dtype=jnp.bfloat16)
    result3 = jax.block_until_ready(polarity_inversion(audio3))
    assert jnp.array_equal(result3, -audio3), "mismatch on bf16 input"

    print("KERNEL_OK")
</pallas_src>

<mosaic_0001>
module attributes {stable_mosaic.version = 11 : i64} {
  func.func @_neg_kernel(%arg0: i32, %arg1: i32, %arg2: memref<2x1024xf32, #tpu.memory_space<vmem>>, %arg3: memref<2x1024xf32, #tpu.memory_space<vmem>>) attributes {dimension_semantics = [#tpu.dimension_semantics<parallel>, #tpu.dimension_semantics<parallel>], iteration_bounds = array<i64: 1, 1>, scalar_prefetch = 0 : i64, scratch_operands = 0 : i64, tpu.core_type = #tpu.core_type<tc>, window_params = [{transform_indices = @transform_0, window_bounds = array<i64: 2, 1024>}, {transform_indices = @transform_1, window_bounds = array<i64: 2, 1024>}]} {
    %c0 = arith.constant 0 : index
    %c0_0 = arith.constant 0 : index
    %0 = vector.load %arg2[%c0, %c0_0] : memref<2x1024xf32, #tpu.memory_space<vmem>>, vector<2x1024xf32>
    %cst = arith.constant 0.000000e+00 : f32
    %1 = vector.broadcast %cst : f32 to vector<2x1024xf32>
    %2 = arith.subf %1, %0 : vector<2x1024xf32>
    %c0_1 = arith.constant 0 : index
    %c0_2 = arith.constant 0 : index
    %3 = vector.load %arg3[%c0_1, %c0_2] : memref<2x1024xf32, #tpu.memory_space<vmem>>, vector<2x1024xf32>
    tpu.vector_store %arg3[%c0_1, %c0_2], %2 {strides = array<i32>} : memref<2x1024xf32, #tpu.memory_space<vmem>>, vector<2x1024xf32>,
    return
  }
  func.func @transform_0(%arg0: i32, %arg1: i32) -> (i32, i32) {
    %c0_i32 = arith.constant 0 : i32
    return %arg0, %arg1 : i32, i32
  }
  func.func @transform_1(%arg0: i32, %arg1: i32) -> (i32, i32) {
    %c0_i32 = arith.constant 0 : i32
    return %arg0, %arg1 : i32, i32
  }
}

</mosaic_0001>

<llo_original>
// kernel: tpu_custom_call.1
$region0: #{tpu_custom_call.1}
  #allocation0 [shape = 'u32[]', space=smem, size = 0x4, offset = 0x4, fixed_abs, tag = 'smem constant byte address 0x4 - core index']
  #allocation1 [shape = 'u32[144,128]{1,0:T(1,128)}', space=vmem, size = 0x12000, scoped, tag = 'internal scratch']
  %s0 = inlined_call_operand.hbm [shape: f32[2,1024], index: 0, kind: input, shape index: {}]
  %s1 = inlined_call_operand.hbm [shape: f32[2,1024], index: 1, kind: output, shape index: {}]
  %s2 = sld [smem:[#allocation0]]
  $region18: #{tpu_custom_call.1} parent=0
    _
  %s4 = ssub.s32 1, %s2
  %s5 = scalar_select 0, %s4, %s2
  $region1: #{tpu_custom_call.1} parent=0
    #allocation2 [shape = 'u8[8192]{0}', space=vmem, size = 0x2000, scoped, tag = 'input window, operand 0, single buffered']
    #allocation3 [shape = 's32[1]{0}', space=sflag, size = 0x4, scoped, tag = 'scoped memory for tpu_custom_call.1']
    #allocation4 [shape = 's32[1]{0}', space=sflag, size = 0x4, scoped, tag = 'scoped memory for tpu_custom_call.1']
    #allocation5 [shape = 'u8[8192]{0}', space=vmem, size = 0x2000, scoped, tag = 'output window, operand 0, single buffered']
    %6 = vsyncpa [#allocation3], 0
    %7 = vsyncpa [#allocation4], 0
    // Predicated region
    $region2: #{tpu_custom_call.1} parent=1 // pred_check
      _
    $region3: #{tpu_custom_call.1} parent=1 // pred_check_branch
      %9 = sbr.rel (0) target = $region5
    $region4: #{tpu_custom_call.1} parent=1 // pred_region
      %s11 = ssub.s32 256, 256
      %12 = vsyncadd [#allocation3], %s11
      %s14 = sshll.u32 [#allocation2], 4
      %s15 = int_to_ptr.vmem [resolvable:$true] %s14
      %17 = dma.hbm_to_vmem [thread:$0]  %s0, 256, %s15, [#allocation3]
    $region5: #{tpu_custom_call.1} parent=1 // pred_fallthru
      _
    // Predicated region
    $region6: #{tpu_custom_call.1} parent=1 // pred_check
      _
    $region7: #{tpu_custom_call.1} parent=1 // pred_check_branch
      %19 = sbr.rel (0) target = $region9
    $region8: #{tpu_custom_call.1} parent=1 // pred_region
      %20 = dma.done [#allocation3], 256
    $region9: #{tpu_custom_call.1} parent=1 // pred_fallthru
      _
    %v21 = vld [vmem:[#allocation2] sm:$0xff]
    %v22 = vld [vmem:[#allocation2 + $0x8] sm:$0xff]
    %v23 = vsub.f32 0.0, %v21
    %v24 = vsub.f32 0.0, %v22
    %25 = vst [vmem:[#allocation5] sm:$0xff] %v23
    %26 = vst [vmem:[#allocation5 + $0x8] sm:$0xff] %v24
    // Predicated region
    $region10: #{tpu_custom_call.1} parent=1 // pred_check
      _
    $region11: #{tpu_custom_call.1} parent=1 // pred_check_branch
      %28 = sbr.rel (0) target = $region13
    $region12: #{tpu_custom_call.1} parent=1 // pred_region
      %s30 = ssub.s32 256, 256
      %31 = vsyncadd [#allocation4], %s30
      %s33 = sshll.u32 [#allocation5], 4
      %s34 = int_to_ptr.vmem [resolvable:$true] %s33
      %36 = dma.vmem_to_hbm [thread:$0]  %s34, 256, %s1, [#allocation4]
    $region13: #{tpu_custom_call.1} parent=1 // pred_fallthru
      _
    // Predicated region
    $region14: #{tpu_custom_call.1} parent=1 // pred_check
      _
    $region15: #{tpu_custom_call.1} parent=1 // pred_check_branch
      %38 = sbr.rel (0) target = $region17
    $region16: #{tpu_custom_call.1} parent=1 // pred_region
      %39 = dma.done [#allocation4], 256
    $region17: #{tpu_custom_call.1} parent=1 // pred_fallthru
      _
    %40 = vsyncpa [#allocation3], 1
    %41 = vsyncpa [#allocation4], 1

</llo_original>
